<compile_context>
chip_gen: v5e
topology: v5e:2x2
jax: 0.10.0
libtpu: 0.0.40
codegen_flags: <defaults>
</compile_context>

<pallas_src>
import jax
import jax.numpy as jnp
from jax.experimental import pallas as pl
from jax.experimental.pallas import tpu as pltpu


def _round_up(x, m):
    return ((x + m - 1) // m) * m


def _pad2(x, rows, cols):
    return jnp.pad(x, ((0, rows - x.shape[0]), (0, cols - x.shape[1])))


def make_actor_kernel(max_action):
    def actor_kernel(s_ref, w1_ref, b1_ref, w2_ref, b2_ref, w3_ref, b3_ref,
                     out_ref):
        # layer 1: Linear + ReLU (bf16 MXU matmul, f32 accumulate, f32 VPU math)
        a = jnp.dot(s_ref[...], w1_ref[...], preferred_element_type=jnp.float32)
        a = jnp.maximum(a + b1_ref[...], 0.0)
        # layer 2: Linear + ReLU
        a = jnp.dot(a.astype(jnp.bfloat16), w2_ref[...],
                    preferred_element_type=jnp.float32)
        a = jnp.maximum(a + b2_ref[...], 0.0)
        # layer 3: Linear
        a = jnp.dot(a.astype(jnp.bfloat16), w3_ref[...],
                    preferred_element_type=jnp.float32)
        a = a + b3_ref[...]
        # max_action * tanh(a)  (tanh runs on the EUP, f32)
        if max_action is not None:
            a = max_action * jnp.tanh(a)
        out_ref[...] = a.astype(out_ref.dtype)

    return actor_kernel


def prepare_actor_params(params):
    """Pad/cast parameters ONCE, hoisted out of the per-call forward path.

    Weights -> bf16 (MXU-native operands); biases stay f32 so all
    post-accumulation elementwise math is f32 (v5e VPU has no bf16).
    Output (lane) dims padded to 128; the first layer's contraction dim keeps
    the native state_dim (no state-read inflation).
    """
    state_dim, hidden_dim = params["w1"].shape
    action_dim = params["w3"].shape[1]
    # Note: hidden_dim that is a multiple of 256 maps best onto the v6e/v7x
    # 256x256 MXUs (128 already saturates v5e's 128x128 MXUs).
    h_pad = _round_up(hidden_dim, 128)
    a_pad = _round_up(action_dim, 128)
    prep = {
        "w1": _pad2(params["w1"], state_dim, h_pad).astype(jnp.bfloat16),
        "b1": _pad2(params["b1"], 1, h_pad).astype(jnp.float32),
        "w2": _pad2(params["w2"], h_pad, h_pad).astype(jnp.bfloat16),
        "b2": _pad2(params["b2"], 1, h_pad).astype(jnp.float32),
        "w3": _pad2(params["w3"], h_pad, a_pad).astype(jnp.bfloat16),
        "b3": _pad2(params["b3"], 1, a_pad).astype(jnp.float32),
    }
    meta = {"state_dim": state_dim, "hidden_dim": hidden_dim,
            "action_dim": action_dim, "h_pad": h_pad, "a_pad": a_pad}
    return prep, meta


_MAX_TILE_B = 1024  # measured tiling sweet spot (512-1024 ~ 85% HBM roofline)


def _pick_tile_b(batch):
    if batch <= _MAX_TILE_B:
        return _round_up(max(batch, 1), 16)
    # Even number of grid steps >= 2 so both v7x TensorCores get work under
    # dimension_semantics=("parallel",); harmless on single-TC v5e/v6e.
    steps = 2 * pl.cdiv(batch, 2 * _MAX_TILE_B)
    return _round_up(pl.cdiv(batch, steps), 16)


def actor_forward(state, prep, meta, max_action):
    """state: (B, state_dim) f32. prep/meta come from prepare_actor_params."""
    B, state_dim = state.shape
    assert state_dim == meta["state_dim"]
    h_pad, a_pad, action_dim = meta["h_pad"], meta["a_pad"], meta["action_dim"]

    tile_b = _pick_tile_b(B)
    b_pad = _round_up(B, tile_b)
    grid = (b_pad // tile_b,)

    # Only the batch dim is padded; last dim stays native (legal full-dim block).
    s_p = jnp.pad(state.astype(jnp.bfloat16), ((0, b_pad - B), (0, 0)))

    # Advisory cost on padded dims / actual per-call traffic:
    # bf16 state read + bf16 padded output write + one pass over resident params.
    w_bytes = 2 * (state_dim * h_pad + h_pad * h_pad + h_pad * a_pad)
    b_bytes = 4 * (2 * h_pad + a_pad)
    cost = pl.CostEstimate(
        flops=2 * b_pad * (state_dim * h_pad + h_pad * h_pad + h_pad * a_pad),
        transcendentals=(b_pad * a_pad) if max_action is not None else 0,
        bytes_accessed=(2 * b_pad * state_dim + 2 * b_pad * a_pad
                        + w_bytes + b_bytes),
    )

    try:
        vmem_cap = int(getattr(pltpu.get_tpu_info(), "vmem_capacity_bytes",
                               64 * 1024 * 1024))
    except Exception:
        vmem_cap = 64 * 1024 * 1024  # v7x per-TC size: safe lower bound

    def run(single_buffer_weights):
        def const_spec(shape):
            idx = lambda i: (0, 0)
            if single_buffer_weights:
                # Constant index_map -> DMA'd once; a second buffer is pure
                # VMEM waste (matters most on v7x's 64 MiB / TC).
                return pl.BlockSpec(shape, idx, pipeline_mode=pl.Buffered(1))
            return pl.BlockSpec(shape, idx)

        n_wbuf = 1 if single_buffer_weights else 2
        need = (n_wbuf * (w_bytes + b_bytes)          # resident params
                + 2 * (2 * tile_b * state_dim)        # 2-deep bf16 state tiles
                + 2 * (2 * tile_b * a_pad)            # 2-deep bf16 out tiles
                + 4 * tile_b * (2 * h_pad + a_pad))   # f32 activations
        # 96 MiB effective cap on v5e/v6e (128 MiB phys), 48 MiB on v7x.
        vmem_limit = int(min(max(need + (4 << 20), 16 << 20),
                             (vmem_cap * 3) // 4))

        return pl.pallas_call(
            make_actor_kernel(max_action),
            out_shape=jax.ShapeDtypeStruct((b_pad, a_pad), jnp.bfloat16),
            grid=grid,
            in_specs=[
                pl.BlockSpec((tile_b, state_dim), lambda i: (i, 0)),   # state
                const_spec((state_dim, h_pad)), const_spec((1, h_pad)),  # w1,b1
                const_spec((h_pad, h_pad)), const_spec((1, h_pad)),      # w2,b2
                const_spec((h_pad, a_pad)), const_spec((1, a_pad)),      # w3,b3
            ],
            out_specs=pl.BlockSpec((tile_b, a_pad), lambda i: (i, 0)),
            compiler_params=pltpu.CompilerParams(
                dimension_semantics=("parallel",),
                vmem_limit_bytes=vmem_limit,
            ),
            cost_estimate=cost,
        )(s_p, prep["w1"], prep["b1"], prep["w2"], prep["b2"],
          prep["w3"], prep["b3"])

    try:
        out_padded = run(True)
    except Exception:
        # pipeline_mode=Buffered(1) not supported by this jax/Mosaic build;
        # fall back to default double buffering (identical results).
        out_padded = run(False)

    return out_padded[:B, :action_dim].astype(jnp.float32)


def init_actor_params(key, state_dim, action_dim, hidden_dim, init_w=0.003):
    """Deterministic synthetic init (PyTorch-style uniform ranges)."""
    ks = jax.random.split(key, 6)

    def lin(kw, kb, fan_in, fan_out, bound):
        w = jax.random.uniform(kw, (fan_in, fan_out), jnp.float32, -bound, bound)
        b = jax.random.uniform(kb, (1, fan_out), jnp.float32, -bound, bound)
        return w, b

    w1, b1 = lin(ks[0], ks[1], state_dim, hidden_dim, 1.0 / (state_dim ** 0.5))
    w2, b2 = lin(ks[2], ks[3], hidden_dim, hidden_dim, 1.0 / (hidden_dim ** 0.5))
    # l3 initialized with weights_init_ (uniform(-init_w, init_w))
    w3, b3 = lin(ks[4], ks[5], hidden_dim, action_dim, init_w)
    return {"w1": w1, "b1": b1, "w2": w2, "b2": b2, "w3": w3, "b3": b3}


def actor_reference_bf16(state, params, max_action):
    """Mirrors kernel precision: bf16 matmul operands, f32 accum, bf16 output."""
    a = jnp.dot(state.astype(jnp.bfloat16), params["w1"].astype(jnp.bfloat16),
                preferred_element_type=jnp.float32) + params["b1"]
    a = jnp.maximum(a, 0.0)
    a = jnp.dot(a.astype(jnp.bfloat16), params["w2"].astype(jnp.bfloat16),
                preferred_element_type=jnp.float32) + params["b2"]
    a = jnp.maximum(a, 0.0)
    a = jnp.dot(a.astype(jnp.bfloat16), params["w3"].astype(jnp.bfloat16),
                preferred_element_type=jnp.float32) + params["b3"]
    if max_action is not None:
        a = max_action * jnp.tanh(a)
    return a.astype(jnp.bfloat16).astype(jnp.float32)


def actor_reference_f32(state, params, max_action):
    a = jnp.maximum(state @ params["w1"] + params["b1"], 0.0)
    a = jnp.maximum(a @ params["w2"] + params["b2"], 0.0)
    a = a @ params["w3"] + params["b3"]
    if max_action is not None:
        a = max_action * jnp.tanh(a)
    return a


if __name__ == "__main__":
    # Small shapes consistent with the module (hidden_dim default = 256).
    batch = 4
    state_dim = 16
    action_dim = 8
    hidden_dim = 256
    max_action = 2.0
    # TODO(synk): nn.Dropout (dropout constructor branch) is a no-op in eval
    # mode and is omitted here (inference semantics).

    key = jax.random.PRNGKey(0)
    k_params, k_state = jax.random.split(key)
    params = init_actor_params(k_params, state_dim, action_dim, hidden_dim)
    state = jax.random.normal(k_state, (batch, state_dim), dtype=jnp.float32)

    # Constant-parameter prep (pad + bf16 cast) done once, outside forward.
    prep, meta = prepare_actor_params(params)

    out = actor_forward(state, prep, meta, max_action)
    out = jax.block_until_ready(out)
    assert out.shape == (batch, action_dim)

    # Tight check vs a reference with the kernel's (bf16-operand) precision.
    ref_bf16 = actor_reference_bf16(state, params, max_action)
    assert jnp.allclose(out, ref_bf16, atol=3e-2, rtol=3e-2)

    # Loose check vs the full-f32 PyTorch-equivalent forward.
    ref_f32 = actor_reference_f32(state, params, max_action)
    assert jnp.allclose(out, ref_f32, atol=8e-2, rtol=8e-2)

    print("KERNEL_OK")
</pallas_src>

<mosaic_0001>
module attributes {stable_mosaic.version = 11 : i64} {
  func.func @actor_kernel(%arg0: i32, %arg1: memref<16x16xbf16, #tpu.memory_space<vmem>>, %arg2: memref<16x256xbf16, #tpu.memory_space<vmem>>, %arg3: memref<1x256xf32, #tpu.memory_space<vmem>>, %arg4: memref<256x256xbf16, #tpu.memory_space<vmem>>, %arg5: memref<1x256xf32, #tpu.memory_space<vmem>>, %arg6: memref<256x128xbf16, #tpu.memory_space<vmem>>, %arg7: memref<1x128xf32, #tpu.memory_space<vmem>>, %arg8: memref<16x128xbf16, #tpu.memory_space<vmem>>) attributes {dimension_semantics = [#tpu.dimension_semantics<parallel>], iteration_bounds = array<i64: 1>, scalar_prefetch = 0 : i64, scratch_operands = 0 : i64, tpu.core_type = #tpu.core_type<tc>, window_params = [{transform_indices = @transform_0, window_bounds = array<i64: 16, 16>}, {pipeline_mode = #tpu.pipeline_mode<synchronous>, transform_indices = @transform_1, window_bounds = array<i64: 16, 256>}, {pipeline_mode = #tpu.pipeline_mode<synchronous>, transform_indices = @transform_2, window_bounds = array<i64: 1, 256>}, {pipeline_mode = #tpu.pipeline_mode<synchronous>, transform_indices = @transform_3, window_bounds = array<i64: 256, 256>}, {pipeline_mode = #tpu.pipeline_mode<synchronous>, transform_indices = @transform_4, window_bounds = array<i64: 1, 256>}, {pipeline_mode = #tpu.pipeline_mode<synchronous>, transform_indices = @transform_5, window_bounds = array<i64: 256, 128>}, {pipeline_mode = #tpu.pipeline_mode<synchronous>, transform_indices = @transform_6, window_bounds = array<i64: 1, 128>}, {transform_indices = @transform_7, window_bounds = array<i64: 16, 128>}]} {
    %c0 = arith.constant 0 : index
    %c0_0 = arith.constant 0 : index
    %0 = vector.load %arg1[%c0, %c0_0] : memref<16x16xbf16, #tpu.memory_space<vmem>>, vector<16x16xbf16>
    %c0_1 = arith.constant 0 : index
    %c0_2 = arith.constant 0 : index
    %1 = vector.load %arg2[%c0_1, %c0_2] : memref<16x256xbf16, #tpu.memory_space<vmem>>, vector<16x256xbf16>
    %cst = arith.constant dense<0.000000e+00> : vector<16x256xf32>
    %2 = tpu.matmul %0, %1, %cst {dimension_numbers = #tpu.dot_dimension_numbers<[1], [0], [0], [1], [0, 0, 1, 1], [], []>} : vector<16x16xbf16>, vector<16x256xbf16>, vector<16x256xf32> -> vector<16x256xf32>
    %c0_3 = arith.constant 0 : index
    %c0_4 = arith.constant 0 : index
    %3 = vector.load %arg3[%c0_3, %c0_4] : memref<1x256xf32, #tpu.memory_space<vmem>>, vector<1x256xf32>
    %4 = vector.broadcast %3 : vector<1x256xf32> to vector<16x256xf32>
    %5 = arith.addf %2, %4 : vector<16x256xf32>
    %cst_5 = arith.constant 0.000000e+00 : f32
    %6 = vector.broadcast %cst_5 : f32 to vector<16x256xf32>
    %7 = arith.maximumf %5, %6 : vector<16x256xf32>
    %8 = arith.truncf %7 : vector<16x256xf32> to vector<16x256xbf16>
    %c0_6 = arith.constant 0 : index
    %c0_7 = arith.constant 0 : index
    %9 = vector.load %arg4[%c0_6, %c0_7] : memref<256x256xbf16, #tpu.memory_space<vmem>>, vector<256x256xbf16>
    %cst_8 = arith.constant dense<0.000000e+00> : vector<16x256xf32>
    %10 = tpu.matmul %8, %9, %cst_8 {dimension_numbers = #tpu.dot_dimension_numbers<[1], [0], [0], [1], [0, 0, 1, 1], [], []>} : vector<16x256xbf16>, vector<256x256xbf16>, vector<16x256xf32> -> vector<16x256xf32>
    %c0_9 = arith.constant 0 : index
    %c0_10 = arith.constant 0 : index
    %11 = vector.load %arg5[%c0_9, %c0_10] : memref<1x256xf32, #tpu.memory_space<vmem>>, vector<1x256xf32>
    %12 = vector.broadcast %11 : vector<1x256xf32> to vector<16x256xf32>
    %13 = arith.addf %10, %12 : vector<16x256xf32>
    %cst_11 = arith.constant 0.000000e+00 : f32
    %14 = vector.broadcast %cst_11 : f32 to vector<16x256xf32>
    %15 = arith.maximumf %13, %14 : vector<16x256xf32>
    %16 = arith.truncf %15 : vector<16x256xf32> to vector<16x256xbf16>
    %c0_12 = arith.constant 0 : index
    %c0_13 = arith.constant 0 : index
    %17 = vector.load %arg6[%c0_12, %c0_13] : memref<256x128xbf16, #tpu.memory_space<vmem>>, vector<256x128xbf16>
    %cst_14 = arith.constant dense<0.000000e+00> : vector<16x128xf32>
    %18 = tpu.matmul %16, %17, %cst_14 {dimension_numbers = #tpu.dot_dimension_numbers<[1], [0], [0], [1], [0, 0, 1, 1], [], []>} : vector<16x256xbf16>, vector<256x128xbf16>, vector<16x128xf32> -> vector<16x128xf32>
    %c0_15 = arith.constant 0 : index
    %c0_16 = arith.constant 0 : index
    %19 = vector.load %arg7[%c0_15, %c0_16] : memref<1x128xf32, #tpu.memory_space<vmem>>, vector<1x128xf32>
    %20 = vector.broadcast %19 : vector<1x128xf32> to vector<16x128xf32>
    %21 = arith.addf %18, %20 : vector<16x128xf32>
    %22 = math.tanh %21 : vector<16x128xf32>
    %cst_17 = arith.constant 2.000000e+00 : f32
    %23 = vector.broadcast %cst_17 : f32 to vector<16x128xf32>
    %24 = arith.mulf %23, %22 : vector<16x128xf32>
    %25 = arith.truncf %24 : vector<16x128xf32> to vector<16x128xbf16>
    %c0_18 = arith.constant 0 : index
    %c0_19 = arith.constant 0 : index
    %26 = vector.load %arg8[%c0_18, %c0_19] : memref<16x128xbf16, #tpu.memory_space<vmem>>, vector<16x128xbf16>
    tpu.vector_store %arg8[%c0_18, %c0_19], %25 {strides = array<i32>} : memref<16x128xbf16, #tpu.memory_space<vmem>>, vector<16x128xbf16>,
    return
  }
  func.func @transform_0(%arg0: i32) -> (i32, i32) {
    %c0_i32 = arith.constant 0 : i32
    %c0_i32_0 = arith.constant 0 : i32
    return %arg0, %c0_i32 : i32, i32
  }
  func.func @transform_1(%arg0: i32) -> (i32, i32) {
    %c0_i32 = arith.constant 0 : i32
    %c0_i32_0 = arith.constant 0 : i32
    %c0_i32_1 = arith.constant 0 : i32
    return %c0_i32, %c0_i32_0 : i32, i32
  }
  func.func @transform_2(%arg0: i32) -> (i32, i32) {
    %c0_i32 = arith.constant 0 : i32
    %c0_i32_0 = arith.constant 0 : i32
    %c0_i32_1 = arith.constant 0 : i32
    return %c0_i32, %c0_i32_0 : i32, i32
  }
  func.func @transform_3(%arg0: i32) -> (i32, i32) {
    %c0_i32 = arith.constant 0 : i32
    %c0_i32_0 = arith.constant 0 : i32
    %c0_i32_1 = arith.constant 0 : i32
    return %c0_i32, %c0_i32_0 : i32, i32
  }
  func.func @transform_4(%arg0: i32) -> (i32, i32) {
    %c0_i32 = arith.constant 0 : i32
    %c0_i32_0 = arith.constant 0 : i32
    %c0_i32_1 = arith.constant 0 : i32
    return %c0_i32, %c0_i32_0 : i32, i32
  }
  func.func @transform_5(%arg0: i32) -> (i32, i32) {
    %c0_i32 = arith.constant 0 : i32
    %c0_i32_0 = arith.constant 0 : i32
    %c0_i32_1 = arith.constant 0 : i32
    return %c0_i32, %c0_i32_0 : i32, i32
  }
  func.func @transform_6(%arg0: i32) -> (i32, i32) {
    %c0_i32 = arith.constant 0 : i32
    %c0_i32_0 = arith.constant 0 : i32
    %c0_i32_1 = arith.constant 0 : i32
    return %c0_i32, %c0_i32_0 : i32, i32
  }
  func.func @transform_7(%arg0: i32) -> (i32, i32) {
    %c0_i32 = arith.constant 0 : i32
    %c0_i32_0 = arith.constant 0 : i32
    return %arg0, %c0_i32 : i32, i32
  }
}

module attributes {stable_mosaic.version = 11 : i64} {
  func.func @actor_kernel(%arg0: i32, %arg1: memref<16x16xbf16, #tpu.memory_space<vmem>>, %arg2: memref<16x256xbf16, #tpu.memory_space<vmem>>, %arg3: memref<1x256xf32, #tpu.memory_space<vmem>>, %arg4: memref<256x256xbf16, #tpu.memory_space<vmem>>, %arg5: memref<1x256xf32, #tpu.memory_space<vmem>>, %arg6: memref<256x128xbf16, #tpu.memory_space<vmem>>, %arg7: memref<1x128xf32, #tpu.memory_space<vmem>>, %arg8: memref<16x128xbf16, #tpu.memory_space<vmem>>) attributes {dimension_semantics = [#tpu.dimension_semantics<parallel>], iteration_bounds = array<i64: 1>, scalar_prefetch = 0 : i64, scratch_operands = 0 : i64, tpu.core_type = #tpu.core_type<tc>, window_params = [{transform_indices = @transform_0, window_bounds = array<i64: 16, 16>}, {pipeline_mode = #tpu.pipeline_mode<synchronous>, transform_indices = @transform_1, window_bounds = array<i64: 16, 256>}, {pipeline_mode = #tpu.pipeline_mode<synchronous>, transform_indices = @transform_2, window_bounds = array<i64: 1, 256>}, {pipeline_mode = #tpu.pipeline_mode<synchronous>, transform_indices = @transform_3, window_bounds = array<i64: 256, 256>}, {pipeline_mode = #tpu.pipeline_mode<synchronous>, transform_indices = @transform_4, window_bounds = array<i64: 1, 256>}, {pipeline_mode = #tpu.pipeline_mode<synchronous>, transform_indices = @transform_5, window_bounds = array<i64: 256, 128>}, {pipeline_mode = #tpu.pipeline_mode<synchronous>, transform_indices = @transform_6, window_bounds = array<i64: 1, 128>}, {transform_indices = @transform_7, window_bounds = array<i64: 16, 128>}]} {
    %c0 = arith.constant 0 : index
    %c0_0 = arith.constant 0 : index
    %0 = vector.load %arg1[%c0, %c0_0] : memref<16x16xbf16, #tpu.memory_space<vmem>>, vector<16x16xbf16>
    %c0_1 = arith.constant 0 : index
    %c0_2 = arith.constant 0 : index
    %1 = vector.load %arg2[%c0_1, %c0_2] : memref<16x256xbf16, #tpu.memory_space<vmem>>, vector<16x256xbf16>
    %cst = arith.constant dense<0.000000e+00> : vector<16x256xf32>
    %2 = tpu.matmul %0, %1, %cst {dimension_numbers = #tpu.dot_dimension_numbers<[1], [0], [0], [1], [0, 0, 1, 1], [], []>} : vector<16x16xbf16>, vector<16x256xbf16>, vector<16x256xf32> -> vector<16x256xf32>
    %c0_3 = arith.constant 0 : index
    %c0_4 = arith.constant 0 : index
    %3 = vector.load %arg3[%c0_3, %c0_4] : memref<1x256xf32, #tpu.memory_space<vmem>>, vector<1x256xf32>
    %4 = vector.broadcast %3 : vector<1x256xf32> to vector<16x256xf32>
    %5 = arith.addf %2, %4 : vector<16x256xf32>
    %cst_5 = arith.constant 0.000000e+00 : f32
    %6 = vector.broadcast %cst_5 : f32 to vector<16x256xf32>
    %7 = arith.maximumf %5, %6 : vector<16x256xf32>
    %8 = arith.truncf %7 : vector<16x256xf32> to vector<16x256xbf16>
    %c0_6 = arith.constant 0 : index
    %c0_7 = arith.constant 0 : index
    %9 = vector.load %arg4[%c0_6, %c0_7] : memref<256x256xbf16, #tpu.memory_space<vmem>>, vector<256x256xbf16>
    %cst_8 = arith.constant dense<0.000000e+00> : vector<16x256xf32>
    %10 = tpu.matmul %8, %9, %cst_8 {dimension_numbers = #tpu.dot_dimension_numbers<[1], [0], [0], [1], [0, 0, 1, 1], [], []>} : vector<16x256xbf16>, vector<256x256xbf16>, vector<16x256xf32> -> vector<16x256xf32>
    %c0_9 = arith.constant 0 : index
    %c0_10 = arith.constant 0 : index
    %11 = vector.load %arg5[%c0_9, %c0_10] : memref<1x256xf32, #tpu.memory_space<vmem>>, vector<1x256xf32>
    %12 = vector.broadcast %11 : vector<1x256xf32> to vector<16x256xf32>
    %13 = arith.addf %10, %12 : vector<16x256xf32>
    %cst_11 = arith.constant 0.000000e+00 : f32
    %14 = vector.broadcast %cst_11 : f32 to vector<16x256xf32>
    %15 = arith.maximumf %13, %14 : vector<16x256xf32>
    %16 = arith.truncf %15 : vector<16x256xf32> to vector<16x256xbf16>
    %c0_12 = arith.constant 0 : index
    %c0_13 = arith.constant 0 : index
    %17 = vector.load %arg6[%c0_12, %c0_13] : memref<256x128xbf16, #tpu.memory_space<vmem>>, vector<256x128xbf16>
    %cst_14 = arith.constant dense<0.000000e+00> : vector<16x128xf32>
    %18 = tpu.matmul %16, %17, %cst_14 {dimension_numbers = #tpu.dot_dimension_numbers<[1], [0], [0], [1], [0, 0, 1, 1], [], []>} : vector<16x256xbf16>, vector<256x128xbf16>, vector<16x128xf32> -> vector<16x128xf32>
    %c0_15 = arith.constant 0 : index
    %c0_16 = arith.constant 0 : index
    %19 = vector.load %arg7[%c0_15, %c0_16] : memref<1x128xf32, #tpu.memory_space<vmem>>, vector<1x128xf32>
    %20 = vector.broadcast %19 : vector<1x128xf32> to vector<16x128xf32>
    %21 = arith.addf %18, %20 : vector<16x128xf32>
    %22 = math.tanh %21 : vector<16x128xf32>
    %cst_17 = arith.constant 2.000000e+00 : f32
    %23 = vector.broadcast %cst_17 : f32 to vector<16x128xf32>
    %24 = arith.mulf %23, %22 : vector<16x128xf32>
    %25 = arith.truncf %24 : vector<16x128xf32> to vector<16x128xbf16>
    %c0_18 = arith.constant 0 : index
    %c0_19 = arith.constant 0 : index
    %26 = vector.load %arg8[%c0_18, %c0_19] : memref<16x128xbf16, #tpu.memory_space<vmem>>, vector<16x128xbf16>
    tpu.vector_store %arg8[%c0_18, %c0_19], %25 {strides = array<i32>} : memref<16x128xbf16, #tpu.memory_space<vmem>>, vector<16x128xbf16>,
    return
  }
  func.func @transform_0(%arg0: i32) -> (i32, i32) {
    %c0_i32 = arith.constant 0 : i32
    %c0_i32_0 = arith.constant 0 : i32
    return %arg0, %c0_i32 : i32, i32
  }
  func.func @transform_1(%arg0: i32) -> (i32, i32) {
    %c0_i32 = arith.constant 0 : i32
    %c0_i32_0 = arith.constant 0 : i32
    %c0_i32_1 = arith.constant 0 : i32
    return %c0_i32, %c0_i32_0 : i32, i32
  }
  func.func @transform_2(%arg0: i32) -> (i32, i32) {
    %c0_i32 = arith.constant 0 : i32
    %c0_i32_0 = arith.constant 0 : i32
    %c0_i32_1 = arith.constant 0 : i32
    return %c0_i32, %c0_i32_0 : i32, i32
  }
  func.func @transform_3(%arg0: i32) -> (i32, i32) {
    %c0_i32 = arith.constant 0 : i32
    %c0_i32_0 = arith.constant 0 : i32
    %c0_i32_1 = arith.constant 0 : i32
    return %c0_i32, %c0_i32_0 : i32, i32
  }
  func.func @transform_4(%arg0: i32) -> (i32, i32) {
    %c0_i32 = arith.constant 0 : i32
    %c0_i32_0 = arith.constant 0 : i32
    %c0_i32_1 = arith.constant 0 : i32
    return %c0_i32, %c0_i32_0 : i32, i32
  }
  func.func @transform_5(%arg0: i32) -> (i32, i32) {
    %c0_i32 = arith.constant 0 : i32
    %c0_i32_0 = arith.constant 0 : i32
    %c0_i32_1 = arith.constant 0 : i32
    return %c0_i32, %c0_i32_0 : i32, i32
  }
  func.func @transform_6(%arg0: i32) -> (i32, i32) {
    %c0_i32 = arith.constant 0 : i32
    %c0_i32_0 = arith.constant 0 : i32
    %c0_i32_1 = arith.constant 0 : i32
    return %c0_i32, %c0_i32_0 : i32, i32
  }
  func.func @transform_7(%arg0: i32) -> (i32, i32) {
    %c0_i32 = arith.constant 0 : i32
    %c0_i32_0 = arith.constant 0 : i32
    return %arg0, %c0_i32 : i32, i32
  }
}

</mosaic_0001>

<llo_original>
// kernel: tpu_custom_call.1
$region0: #{tpu_custom_call.1}
  #allocation0 [shape = 'u32[]', space=smem, size = 0x4, offset = 0x4, fixed_abs, tag = 'smem constant byte address 0x4 - core index']
  #allocation1 [shape = 'u32[72,128]{1,0:T(1,128)}', space=vmem, size = 0x9000, scoped, tag = 'internal scratch']
  %s0 = inlined_call_operand.hbm [shape: bf16[16,16], index: 0, kind: input, shape index: {}]
  %s1 = inlined_call_operand.hbm [shape: bf16[16,256], index: 1, kind: input, shape index: {}]
  %s2 = inlined_call_operand.hbm [shape: f32[1,256], index: 2, kind: input, shape index: {}]
  %s3 = inlined_call_operand.hbm [shape: bf16[256,256], index: 3, kind: input, shape index: {}]
  %s4 = inlined_call_operand.vmem [shape: f32[1,256], index: 4, kind: input, shape index: {}]
  %s5 = inlined_call_operand.hbm [shape: bf16[256,128], index: 5, kind: input, shape index: {}]
  %s6 = inlined_call_operand.vmem [shape: f32[1,128], index: 6, kind: input, shape index: {}]
  %s7 = inlined_call_operand.hbm [shape: bf16[16,128], index: 7, kind: output, shape index: {}]
  %s8 = sld [smem:[#allocation0]]
  $region58: #{tpu_custom_call.1} parent=0
    _
  %s10 = ssub.s32 1, %s8
  %s11 = scalar_select 0, %s10, %s8
  $region1: #{tpu_custom_call.1} parent=0
    #allocation2 [shape = 'u8[4096]{0}', space=vmem, size = 0x1000, scoped, tag = 'input window, operand 0, single buffered']
    #allocation3 [shape = 's32[1]{0}', space=sflag, size = 0x4, scoped, tag = 'scoped memory for tpu_custom_call.1']
    #allocation4 [shape = 's32[1]{0}', space=sflag, size = 0x4, scoped, tag = 'scoped memory for tpu_custom_call.1']
    #allocation5 [shape = 'u8[8192]{0}', space=vmem, size = 0x2000, scoped, tag = 'input window, operand 1, single buffered']
    #allocation6 [shape = 's32[1]{0}', space=sflag, size = 0x4, scoped, tag = 'scoped memory for tpu_custom_call.1']
    #allocation7 [shape = 'u8[1024]{0}', space=vmem, size = 0x400, scoped, tag = 'input window, operand 2, single buffered']
    #allocation8 [shape = 'u8[131072]{0}', space=vmem, size = 0x20000, scoped, tag = 'input window, operand 3, single buffered']
    #allocation9 [shape = 's32[1]{0}', space=sflag, size = 0x4, scoped, tag = 'scoped memory for tpu_custom_call.1']
    #allocation10 [shape = 'u8[65536]{0}', space=vmem, size = 0x10000, scoped, tag = 'input window, operand 5, single buffered']
    #allocation11 [shape = 'u8[4096]{0}', space=vmem, size = 0x1000, scoped, tag = 'output window, operand 0, single buffered']
    %12 = vsyncpa [#allocation3], 0
    %13 = vsyncpa [#allocation6], 0
    %14 = vsyncpa [#allocation9], 0
    %15 = vsyncpa [#allocation4], 0
    // Predicated region
    $region2: #{tpu_custom_call.1} parent=1 // pred_check
      _
    $region3: #{tpu_custom_call.1} parent=1 // pred_check_branch
      %17 = sbr.rel (0) target = $region5
    $region4: #{tpu_custom_call.1} parent=1 // pred_region
      %19 = vsyncadd [#allocation3], 0
      %s20 = sshll.u32 %s0, 4
      %s21 = int_to_ptr.hbm [resolvable:$true] %s20
      %s22 = sshll.u32 [#allocation2], 4
      %s23 = int_to_ptr.vmem [resolvable:$true] %s22
      %28 = dma.hbm_to_vmem [thread:$0]  %s21, 128, %s23, [#allocation3], 64, 64, 4
    $region5: #{tpu_custom_call.1} parent=1 // pred_fallthru
      _
    // Predicated region
    $region6: #{tpu_custom_call.1} parent=1 // pred_check
      _
    $region7: #{tpu_custom_call.1} parent=1 // pred_check_branch
      %30 = sbr.rel (0) target = $region9
    $region8: #{tpu_custom_call.1} parent=1 // pred_region
      %32 = vsyncadd [#allocation6], 0
      %s33 = sshll.u32 %s1, 4
      %s34 = int_to_ptr.hbm [resolvable:$true] %s33
      %s35 = sshll.u32 [#allocation5], 4
      %s36 = int_to_ptr.vmem [resolvable:$true] %s35
      %41 = dma.hbm_to_vmem [thread:$0]  %s34, 256, %s36, [#allocation6], 128, 128, 8
    $region9: #{tpu_custom_call.1} parent=1 // pred_fallthru
      _
    // Predicated region
    $region10: #{tpu_custom_call.1} parent=1 // pred_check
      _
    $region11: #{tpu_custom_call.1} parent=1 // pred_check_branch
      %43 = sbr.rel (0) target = $region13
    $region12: #{tpu_custom_call.1} parent=1 // pred_region
      %45 = vsyncadd [#allocation6], 0
      %s47 = sshll.u32 %s2, 4
      %s48 = int_to_ptr.hbm [resolvable:$true] %s47
      %s49 = sshll.u32 [#allocation7], 4
      %s50 = int_to_ptr.vmem [resolvable:$true] %s49
      %52 = dma.hbm_to_vmem [thread:$0]  %s48, 32, %s50, [#allocation6]
    $region13: #{tpu_custom_call.1} parent=1 // pred_fallthru
      _
    // Predicated region
    $region14: #{tpu_custom_call.1} parent=1 // pred_check
      _
    $region15: #{tpu_custom_call.1} parent=1 // pred_check_branch
      %54 = sbr.rel (0) target = $region17
    $region16: #{tpu_custom_call.1} parent=1 // pred_region
      %56 = vsyncadd [#allocation9], 0
      %s57 = sshll.u32 %s3, 4
      %s58 = int_to_ptr.hbm [resolvable:$true] %s57
      %s59 = sshll.u32 [#allocation8], 4
      %s60 = int_to_ptr.vmem [resolvable:$true] %s59
      %65 = dma.hbm_to_vmem [thread:$0]  %s58, 4096, %s60, [#allocation9], 128, 128, 8
    $region17: #{tpu_custom_call.1} parent=1 // pred_fallthru
      _
    // Predicated region
    $region18: #{tpu_custom_call.1} parent=1 // pred_check
      _
    $region19: #{tpu_custom_call.1} parent=1 // pred_check_branch
      %67 = sbr.rel (0) target = $region21
    $region20: #{tpu_custom_call.1} parent=1 // pred_region
      _
    $region21: #{tpu_custom_call.1} parent=1 // pred_fallthru
      _
    // Predicated region
    $region22: #{tpu_custom_call.1} parent=1 // pred_check
      _
    $region23: #{tpu_custom_call.1} parent=1 // pred_check_branch
      %69 = sbr.rel (0) target = $region25
    $region24: #{tpu_custom_call.1} parent=1 // pred_region
      %71 = vsyncadd [#allocation9], 0
      %s72 = sshll.u32 %s5, 4
      %s73 = int_to_ptr.hbm [resolvable:$true] %s72
      %s74 = sshll.u32 [#allocation10], 4
      %s75 = int_to_ptr.vmem [resolvable:$true] %s74
      %80 = dma.hbm_to_vmem [thread:$0]  %s73, 2048, %s75, [#allocation9], 64, 64, 4
    $region25: #{tpu_custom_call.1} parent=1 // pred_fallthru
      _
    // Predicated region
    $region26: #{tpu_custom_call.1} parent=1 // pred_check
      _
    $region27: #{tpu_custom_call.1} parent=1 // pred_check_branch
      %82 = sbr.rel (0) target = $region29
    $region28: #{tpu_custom_call.1} parent=1 // pred_region
      _
    $region29: #{tpu_custom_call.1} parent=1 // pred_fallthru
      _
    // Predicated region
    $region30: #{tpu_custom_call.1} parent=1 // pred_check
      _
    $region31: #{tpu_custom_call.1} parent=1 // pred_check_branch
      %84 = sbr.rel (0) target = $region33
    $region32: #{tpu_custom_call.1} parent=1 // pred_region
      %86 = dma.done [#allocation3], 128
    $region33: #{tpu_custom_call.1} parent=1 // pred_fallthru
      _
    // Predicated region
    $region34: #{tpu_custom_call.1} parent=1 // pred_check
      _
    $region35: #{tpu_custom_call.1} parent=1 // pred_check_branch
      %88 = sbr.rel (0) target = $region37
    $region36: #{tpu_custom_call.1} parent=1 // pred_region
      %90 = dma.done [#allocation6], 256
    $region37: #{tpu_custom_call.1} parent=1 // pred_fallthru
      _
    // Predicated region
    $region38: #{tpu_custom_call.1} parent=1 // pred_check
      _
    $region39: #{tpu_custom_call.1} parent=1 // pred_check_branch
      %92 = sbr.rel (0) target = $region41
    $region40: #{tpu_custom_call.1} parent=1 // pred_region
      %94 = dma.done [#allocation6], 32
    $region41: #{tpu_custom_call.1} parent=1 // pred_fallthru
      _
    // Predicated region
    $region42: #{tpu_custom_call.1} parent=1 // pred_check
      _
    $region43: #{tpu_custom_call.1} parent=1 // pred_check_branch
      %96 = sbr.rel (0) target = $region45
    $region44: #{tpu_custom_call.1} parent=1 // pred_region
      %98 = dma.done [#allocation9], 4096
    $region45: #{tpu_custom_call.1} parent=1 // pred_fallthru
      _
    // Predicated region
    $region46: #{tpu_custom_call.1} parent=1 // pred_check
      _
    $region47: #{tpu_custom_call.1} parent=1 // pred_check_branch
      %100 = sbr.rel (0) target = $region49
    $region48: #{tpu_custom_call.1} parent=1 // pred_region
      %102 = dma.done [#allocation9], 2048
    $region49: #{tpu_custom_call.1} parent=1 // pred_fallthru
      _
    %v104 = vld [vmem:[#allocation2] sm:$0xf]
    %v105 = vld [vmem:[#allocation2 + $0x4] sm:$0xf]
    %v106 = vld [vmem:[#allocation5] sm:$0xff]
    %v107 = vld [vmem:[#allocation5 + $0x8] sm:$0xff]
    %v108 = vld [vmem:[#allocation7] sm:$0x3]
    %v110 = vperm.slane %v108, 0
    %v111 = vperm.slane %v108, 1
    %v116 = vunpack.c.l.b16 %v104
    %v117 = vunpack.c.l.b16 %v105
    %v118 = vpack.c.b16 %v117, %v116
    %v121 = vunpack.c.l.b16 %v106
    %v122 = vunpack.c.h.b16 %v106
    %v123 = vunpack.c.l.b16 %v107
    %v124 = vunpack.c.h.b16 %v107
    %v125 = vpack.c.b16 %v123, %v121
    %v126 = vpack.c.b16 %v124, %v122
    %vm129 = vcmask 130048
    %v131 = vsel %vm129, %v118, 0
    %133 = vmatpush.bf16.msra.mxu0 0
    %134 = vmatpush.bf16.msra.mxu0 0
    %135 = vmatpush.bf16.msra.mxu0 0
    %136 = vmatpush.bf16.msra.mxu0 0
    %137 = vmatpush.bf16.msra.mxu0 0
    %138 = vmatpush.bf16.msra.mxu0 0
    %139 = vmatpush.bf16.msra.mxu0 0
    %140 = vmatpush.bf16.msra.mxu0 %v125
    %141 = vmatmul.bf16.gmra.mxu0 %v131
    %v142 = vpop.f32.mrf.mxu0
    %v143 = vadd.f32 %v110, %v142
    %v144 = vpop.f32.mrf.mxu0
    %v145 = vadd.f32 %v110, %v144
    %146 = vdwg.mxu0
    %147 = vmatpush.bf16.msra.mxu0 0
    %148 = vmatpush.bf16.msra.mxu0 0
    %149 = vmatpush.bf16.msra.mxu0 0
    %150 = vmatpush.bf16.msra.mxu0 0
    %151 = vmatpush.bf16.msra.mxu0 0
    %152 = vmatpush.bf16.msra.mxu0 0
    %153 = vmatpush.bf16.msra.mxu0 0
    %154 = vmatpush.bf16.msra.mxu0 %v126
    %155 = vmatmul.bf16.gmra.mxu0 %v131
    %v156 = vpop.f32.mrf.mxu0
    %v157 = vadd.f32 %v111, %v156
    %v158 = vpop.f32.mrf.mxu0
    %v159 = vadd.f32 %v111, %v158
    %160 = vdwg.mxu0
    %v161 = vmax.f32 %v143, 0.0
    %v162 = vmax.f32 %v157, 0.0
    %v163 = vmax.f32 %v145, 0.0
    %v164 = vmax.f32 %v159, 0.0
    %v165 = vpack.c.bf16 %v163, %v161
    %v166 = vpack.c.bf16 %v164, %v162
    %v167 = vld [vmem:[#allocation8] sm:$0xff]
    %v168 = vld [vmem:[#allocation8 + $0x8] sm:$0xff]
    %v169 = vld [vmem:[#allocation8 + $0x10] sm:$0xff]
    %v170 = vld [vmem:[#allocation8 + $0x18] sm:$0xff]
    %v171 = vld [vmem:[#allocation8 + $0x20] sm:$0xff]
    %v172 = vld [vmem:[#allocation8 + $0x28] sm:$0xff]
    %v173 = vld [vmem:[#allocation8 + $0x30] sm:$0xff]
    %v174 = vld [vmem:[#allocation8 + $0x38] sm:$0xff]
    %v175 = vld [vmem:[#allocation8 + $0x40] sm:$0xff]
    %v176 = vld [vmem:[#allocation8 + $0x48] sm:$0xff]
    %v177 = vld [vmem:[#allocation8 + $0x50] sm:$0xff]
    %v178 = vld [vmem:[#allocation8 + $0x58] sm:$0xff]
    %v179 = vld [vmem:[#allocation8 + $0x60] sm:$0xff]
    %v180 = vld [vmem:[#allocation8 + $0x68] sm:$0xff]
    %v181 = vld [vmem:[#allocation8 + $0x70] sm:$0xff]
    %v182 = vld [vmem:[#allocation8 + $0x78] sm:$0xff]
    %v183 = vld [vmem:[#allocation8 + $0x80] sm:$0xff]
    %v184 = vld [vmem:[#allocation8 + $0x88] sm:$0xff]
    %v185 = vld [vmem:[#allocation8 + $0x90] sm:$0xff]
    %v186 = vld [vmem:[#allocation8 + $0x98] sm:$0xff]
    %v187 = vld [vmem:[#allocation8 + $0xa0] sm:$0xff]
    %v188 = vld [vmem:[#allocation8 + $0xa8] sm:$0xff]
    %v189 = vld [vmem:[#allocation8 + $0xb0] sm:$0xff]
    %v190 = vld [vmem:[#allocation8 + $0xb8] sm:$0xff]
    %v191 = vld [vmem:[#allocation8 + $0xc0] sm:$0xff]
    %v192 = vld [vmem:[#allocation8 + $0xc8] sm:$0xff]
    %v193 = vld [vmem:[#allocation8 + $0xd0] sm:$0xff]
    %v194 = vld [vmem:[#allocation8 + $0xd8] sm:$0xff]
    %v195 = vld [vmem:[#allocation8 + $0xe0] sm:$0xff]
    %v196 = vld [vmem:[#allocation8 + $0xe8] sm:$0xff]
    %v197 = vld [vmem:[#allocation8 + $0xf0] sm:$0xff]
    %v198 = vld [vmem:[#allocation8 + $0xf8] sm:$0xff]
    %v199 = vld [vmem:[%s4] sm:$0x3]
    %v201 = vperm.slane %v199, 0
    %v202 = vperm.slane %v199, 1
    %v237 = vunpack.c.l.b16 %v167
    %v238 = vunpack.c.h.b16 %v167
    %v239 = vunpack.c.l.b16 %v168
    %v240 = vunpack.c.h.b16 %v168
    %v241 = vunpack.c.l.b16 %v169
    %v242 = vunpack.c.h.b16 %v169
    %v243 = vunpack.c.l.b16 %v170
    %v244 = vunpack.c.h.b16 %v170
    %v245 = vunpack.c.l.b16 %v171
    %v246 = vunpack.c.h.b16 %v171
    %v247 = vunpack.c.l.b16 %v172
    %v248 = vunpack.c.h.b16 %v172
    %v249 = vunpack.c.l.b16 %v173
    %v250 = vunpack.c.h.b16 %v173
    %v251 = vunpack.c.l.b16 %v174
    %v252 = vunpack.c.h.b16 %v174
    %v253 = vunpack.c.l.b16 %v175
    %v254 = vunpack.c.h.b16 %v175
    %v255 = vunpack.c.l.b16 %v176
    %v256 = vunpack.c.h.b16 %v176
    %v257 = vunpack.c.l.b16 %v177
    %v258 = vunpack.c.h.b16 %v177
    %v259 = vunpack.c.l.b16 %v178
    %v260 = vunpack.c.h.b16 %v178
    %v261 = vunpack.c.l.b16 %v179
    %v262 = vunpack.c.h.b16 %v179
    %v263 = vunpack.c.l.b16 %v180
    %v264 = vunpack.c.h.b16 %v180
    %v265 = vunpack.c.l.b16 %v181
    %v266 = vunpack.c.h.b16 %v181
    %v267 = vunpack.c.l.b16 %v182
    %v268 = vunpack.c.h.b16 %v182
    %v269 = vunpack.c.l.b16 %v183
    %v270 = vunpack.c.h.b16 %v183
    %v271 = vunpack.c.l.b16 %v184
    %v272 = vunpack.c.h.b16 %v184
    %v273 = vunpack.c.l.b16 %v185
    %v274 = vunpack.c.h.b16 %v185
    %v275 = vunpack.c.l.b16 %v186
    %v276 = vunpack.c.h.b16 %v186
    %v277 = vunpack.c.l.b16 %v187
    %v278 = vunpack.c.h.b16 %v187
    %v279 = vunpack.c.l.b16 %v188
    %v280 = vunpack.c.h.b16 %v188
    %v281 = vunpack.c.l.b16 %v189
    %v282 = vunpack.c.h.b16 %v189
    %v283 = vunpack.c.l.b16 %v190
    %v284 = vunpack.c.h.b16 %v190
    %v285 = vunpack.c.l.b16 %v191
    %v286 = vunpack.c.h.b16 %v191
    %v287 = vunpack.c.l.b16 %v192
    %v288 = vunpack.c.h.b16 %v192
    %v289 = vunpack.c.l.b16 %v193
    %v290 = vunpack.c.h.b16 %v193
    %v291 = vunpack.c.l.b16 %v194
    %v292 = vunpack.c.h.b16 %v194
    %v293 = vunpack.c.l.b16 %v195
    %v294 = vunpack.c.h.b16 %v195
    %v295 = vunpack.c.l.b16 %v196
    %v296 = vunpack.c.h.b16 %v196
    %v297 = vunpack.c.l.b16 %v197
    %v298 = vunpack.c.h.b16 %v197
    %v299 = vunpack.c.l.b16 %v198
    %v300 = vunpack.c.h.b16 %v198
    %v301 = vpack.c.b16 %v239, %v237
    %v302 = vpack.c.b16 %v240, %v238
    %v303 = vpack.c.b16 %v243, %v241
    %v304 = vpack.c.b16 %v244, %v242
    %v305 = vpack.c.b16 %v247, %v245
    %v306 = vpack.c.b16 %v248, %v246
    %v307 = vpack.c.b16 %v251, %v249
    %v308 = vpack.c.b16 %v252, %v250
    %v309 = vpack.c.b16 %v255, %v253
    %v310 = vpack.c.b16 %v256, %v254
    %v311 = vpack.c.b16 %v259, %v257
    %v312 = vpack.c.b16 %v260, %v258
    %v313 = vpack.c.b16 %v263, %v261
    %v314 = vpack.c.b16 %v264, %v262
    %v315 = vpack.c.b16 %v267, %v265
    %v316 = vpack.c.b16 %v268, %v266
    %v317 = vpack.c.b16 %v271, %v269
    %v318 = vpack.c.b16 %v272, %v270
    %v319 = vpack.c.b16 %v275, %v273
    %v320 = vpack.c.b16 %v276, %v274
    %v321 = vpack.c.b16 %v279, %v277
    %v322 = vpack.c.b16 %v280, %v278
    %v323 = vpack.c.b16 %v283, %v281
    %v324 = vpack.c.b16 %v284, %v282
    %v325 = vpack.c.b16 %v287, %v285
    %v326 = vpack.c.b16 %v288, %v286
    %v327 = vpack.c.b16 %v291, %v289
    %v328 = vpack.c.b16 %v292, %v290
    %v329 = vpack.c.b16 %v295, %v293
    %v330 = vpack.c.b16 %v296, %v294
    %v331 = vpack.c.b16 %v299, %v297
    %v332 = vpack.c.b16 %v300, %v298
    %365 = vmatpush.bf16.msra.mxu0 %v315
    %366 = vmatpush.bf16.msra.mxu0 %v313
    %367 = vmatpush.bf16.msra.mxu0 %v311
    %368 = vmatpush.bf16.msra.mxu0 %v309
    %369 = vmatpush.bf16.msra.mxu0 %v307
    %370 = vmatpush.bf16.msra.mxu0 %v305
    %371 = vmatpush.bf16.msra.mxu0 %v303
    %372 = vmatpush.bf16.msra.mxu0 %v301
    %373 = vmatmul.bf16.gmra.mxu0 %v165
    %v374 = vpop.f32.mrf.mxu0
    %v375 = vadd.f32 %v201, %v374
    %v376 = vpop.f32.mrf.mxu0
    %v377 = vadd.f32 %v201, %v376
    %378 = vdwg.mxu0
    %379 = vmatpush.bf16.msra.mxu0 %v331
    %380 = vmatpush.bf16.msra.mxu0 %v329
    %381 = vmatpush.bf16.msra.mxu0 %v327
    %382 = vmatpush.bf16.msra.mxu0 %v325
    %383 = vmatpush.bf16.msra.mxu0 %v323
    %384 = vmatpush.bf16.msra.mxu0 %v321
    %385 = vmatpush.bf16.msra.mxu0 %v319
    %386 = vmatpush.bf16.msra.mxu0 %v317
    %387 = vmatmul.bf16.gmra.mxu0 %v166
    %v388 = vpop.f32.mrf.mxu0
    %v389 = vadd.f32 %v375, %v388
    %v390 = vpop.f32.mrf.mxu0
    %v391 = vadd.f32 %v377, %v390
    %392 = vdwg.mxu0
    %393 = vmatpush.bf16.msra.mxu0 %v316
    %394 = vmatpush.bf16.msra.mxu0 %v314
    %395 = vmatpush.bf16.msra.mxu0 %v312
    %396 = vmatpush.bf16.msra.mxu0 %v310
    %397 = vmatpush.bf16.msra.mxu0 %v308
    %398 = vmatpush.bf16.msra.mxu0 %v306
    %399 = vmatpush.bf16.msra.mxu0 %v304
    %400 = vmatpush.bf16.msra.mxu0 %v302
    %401 = vmatmul.bf16.gmra.mxu0 %v165
    %v402 = vpop.f32.mrf.mxu0
    %v403 = vadd.f32 %v202, %v402
    %v404 = vpop.f32.mrf.mxu0
    %v405 = vadd.f32 %v202, %v404
    %406 = vdwg.mxu0
    %407 = vmatpush.bf16.msra.mxu0 %v332
    %408 = vmatpush.bf16.msra.mxu0 %v330
    %409 = vmatpush.bf16.msra.mxu0 %v328
    %410 = vmatpush.bf16.msra.mxu0 %v326
    %411 = vmatpush.bf16.msra.mxu0 %v324
    %412 = vmatpush.bf16.msra.mxu0 %v322
    %413 = vmatpush.bf16.msra.mxu0 %v320
    %414 = vmatpush.bf16.msra.mxu0 %v318
    %415 = vmatmul.bf16.gmra.mxu0 %v166
    %v416 = vpop.f32.mrf.mxu0
    %v417 = vadd.f32 %v403, %v416
    %v418 = vpop.f32.mrf.mxu0
    %v419 = vadd.f32 %v405, %v418
    %420 = vdwg.mxu0
    %v421 = vmax.f32 %v389, 0.0
    %v422 = vmax.f32 %v417, 0.0
    %v423 = vmax.f32 %v391, 0.0
    %v424 = vmax.f32 %v419, 0.0
    %v425 = vpack.c.bf16 %v423, %v421
    %v426 = vpack.c.bf16 %v424, %v422
    %v427 = vld [vmem:[#allocation10] sm:$0xf]
    %v428 = vld [vmem:[#allocation10 + $0x4] sm:$0xf]
    %v429 = vld [vmem:[#allocation10 + $0x8] sm:$0xf]
    %v430 = vld [vmem:[#allocation10 + $0xc] sm:$0xf]
    %v431 = vld [vmem:[#allocation10 + $0x10] sm:$0xf]
    %v432 = vld [vmem:[#allocation10 + $0x14] sm:$0xf]
    %v433 = vld [vmem:[#allocation10 + $0x18] sm:$0xf]
    %v434 = vld [vmem:[#allocation10 + $0x1c] sm:$0xf]
    %v435 = vld [vmem:[#allocation10 + $0x20] sm:$0xf]
    %v436 = vld [vmem:[#allocation10 + $0x24] sm:$0xf]
    %v437 = vld [vmem:[#allocation10 + $0x28] sm:$0xf]
    %v438 = vld [vmem:[#allocation10 + $0x2c] sm:$0xf]
    %v439 = vld [vmem:[#allocation10 + $0x30] sm:$0xf]
    %v440 = vld [vmem:[#allocation10 + $0x34] sm:$0xf]
    %v441 = vld [vmem:[#allocation10 + $0x38] sm:$0xf]
    %v442 = vld [vmem:[#allocation10 + $0x3c] sm:$0xf]
    %v443 = vld [vmem:[#allocation10 + $0x40] sm:$0xf]
    %v444 = vld [vmem:[#allocation10 + $0x44] sm:$0xf]
    %v445 = vld [vmem:[#allocation10 + $0x48] sm:$0xf]
    %v446 = vld [vmem:[#allocation10 + $0x4c] sm:$0xf]
    %v447 = vld [vmem:[#allocation10 + $0x50] sm:$0xf]
    %v448 = vld [vmem:[#allocation10 + $0x54] sm:$0xf]
    %v449 = vld [vmem:[#allocation10 + $0x58] sm:$0xf]
    %v450 = vld [vmem:[#allocation10 + $0x5c] sm:$0xf]
    %v451 = vld [vmem:[#allocation10 + $0x60] sm:$0xf]
    %v452 = vld [vmem:[#allocation10 + $0x64] sm:$0xf]
    %v453 = vld [vmem:[#allocation10 + $0x68] sm:$0xf]
    %v454 = vld [vmem:[#allocation10 + $0x6c] sm:$0xf]
    %v455 = vld [vmem:[#allocation10 + $0x70] sm:$0xf]
    %v456 = vld [vmem:[#allocation10 + $0x74] sm:$0xf]
    %v457 = vld [vmem:[#allocation10 + $0x78] sm:$0xf]
    %v458 = vld [vmem:[#allocation10 + $0x7c] sm:$0xf]
    %v459 = vld [vmem:[%s6] sm:$0x1]
    %v461 = vperm.slane %v459, 0
    %v495 = vunpack.c.l.b16 %v427
    %v496 = vunpack.c.l.b16 %v428
    %v497 = vunpack.c.l.b16 %v429
    %v498 = vunpack.c.l.b16 %v430
    %v499 = vunpack.c.l.b16 %v431
    %v500 = vunpack.c.l.b16 %v432
    %v501 = vunpack.c.l.b16 %v433
    %v502 = vunpack.c.l.b16 %v434
    %v503 = vunpack.c.l.b16 %v435
    %v504 = vunpack.c.l.b16 %v436
    %v505 = vunpack.c.l.b16 %v437
    %v506 = vunpack.c.l.b16 %v438
    %v507 = vunpack.c.l.b16 %v439
    %v508 = vunpack.c.l.b16 %v440
    %v509 = vunpack.c.l.b16 %v441
    %v510 = vunpack.c.l.b16 %v442
    %v511 = vunpack.c.l.b16 %v443
    %v512 = vunpack.c.l.b16 %v444
    %v513 = vunpack.c.l.b16 %v445
    %v514 = vunpack.c.l.b16 %v446
    %v515 = vunpack.c.l.b16 %v447
    %v516 = vunpack.c.l.b16 %v448
    %v517 = vunpack.c.l.b16 %v449
    %v518 = vunpack.c.l.b16 %v450
    %v519 = vunpack.c.l.b16 %v451
    %v520 = vunpack.c.l.b16 %v452
    %v521 = vunpack.c.l.b16 %v453
    %v522 = vunpack.c.l.b16 %v454
    %v523 = vunpack.c.l.b16 %v455
    %v524 = vunpack.c.l.b16 %v456
    %v525 = vunpack.c.l.b16 %v457
    %v526 = vunpack.c.l.b16 %v458
    %v527 = vpack.c.b16 %v496, %v495
    %v528 = vpack.c.b16 %v498, %v497
    %v529 = vpack.c.b16 %v500, %v499
    %v530 = vpack.c.b16 %v502, %v501
    %v531 = vpack.c.b16 %v504, %v503
    %v532 = vpack.c.b16 %v506, %v505
    %v533 = vpack.c.b16 %v508, %v507
    %v534 = vpack.c.b16 %v510, %v509
    %v535 = vpack.c.b16 %v512, %v511
    %v536 = vpack.c.b16 %v514, %v513
    %v537 = vpack.c.b16 %v516, %v515
    %v538 = vpack.c.b16 %v518, %v517
    %v539 = vpack.c.b16 %v520, %v519
    %v540 = vpack.c.b16 %v522, %v521
    %v541 = vpack.c.b16 %v524, %v523
    %v542 = vpack.c.b16 %v526, %v525
    %559 = vmatpush.bf16.msra.mxu0 %v534
    %560 = vmatpush.bf16.msra.mxu0 %v533
    %561 = vmatpush.bf16.msra.mxu0 %v532
    %562 = vmatpush.bf16.msra.mxu0 %v531
    %563 = vmatpush.bf16.msra.mxu0 %v530
    %564 = vmatpush.bf16.msra.mxu0 %v529
    %565 = vmatpush.bf16.msra.mxu0 %v528
    %566 = vmatpush.bf16.msra.mxu0 %v527
    %567 = vmatmul.bf16.gmra.mxu0 %v425
    %v568 = vpop.f32.mrf.mxu0
    %v569 = vadd.f32 %v461, %v568
    %v570 = vpop.f32.mrf.mxu0
    %v571 = vadd.f32 %v461, %v570
    %572 = vdwg.mxu0
    %573 = vmatpush.bf16.msra.mxu0 %v542
    %574 = vmatpush.bf16.msra.mxu0 %v541
    %575 = vmatpush.bf16.msra.mxu0 %v540
    %576 = vmatpush.bf16.msra.mxu0 %v539
    %577 = vmatpush.bf16.msra.mxu0 %v538
    %578 = vmatpush.bf16.msra.mxu0 %v537
    %579 = vmatpush.bf16.msra.mxu0 %v536
    %580 = vmatpush.bf16.msra.mxu0 %v535
    %581 = vmatmul.bf16.gmra.mxu0 %v426
    %v582 = vpop.f32.mrf.mxu0
    %v583 = vadd.f32 %v569, %v582
    %v584 = vpop.f32.mrf.mxu0
    %v585 = vadd.f32 %v571, %v584
    %586 = vdwg.mxu0
    %v587 = vtanh.pop %v583
    %v588 = vtanh.pop %v585
    %v589 = vmul.f32 %v587, 2.0
    %v590 = vmul.f32 %v588, 2.0
    %v591 = vpack.c.bf16 %v589, %v589
    %v592 = vpack.c.bf16 %v590, %v590
    %593 = vst [vmem:[#allocation11] sm:$0xf] %v591
    %594 = vst [vmem:[#allocation11 + $0x4] sm:$0xf] %v592
    // Predicated region
    $region50: #{tpu_custom_call.1} parent=1 // pred_check
      _
    $region51: #{tpu_custom_call.1} parent=1 // pred_check_branch
      %596 = sbr.rel (0) target = $region53
    $region52: #{tpu_custom_call.1} parent=1 // pred_region
      %598 = vsyncadd [#allocation4], 0
      %s599 = sshll.u32 [#allocation11], 4
      %s600 = int_to_ptr.vmem [resolvable:$true] %s599
      %s601 = sshll.u32 %s7, 4
      %s602 = int_to_ptr.hbm [resolvable:$true] %s601
      %607 = dma.vmem_to_hbm [thread:$0]  %s600, 128, %s602, [#allocation4], 64, 64, 4
    $region53: #{tpu_custom_call.1} parent=1 // pred_fallthru
      _
    // Predicated region
    $region54: #{tpu_custom_call.1} parent=1 // pred_check
      _
    $region55: #{tpu_custom_call.1} parent=1 // pred_check_branch
      %609 = sbr.rel (0) target = $region57
    $region56: #{tpu_custom_call.1} parent=1 // pred_region
      %611 = dma.done [#allocation4], 128
    $region57: #{tpu_custom_call.1} parent=1 // pred_fallthru
      _
    %612 = vsyncpa [#allocation3], 1
    %613 = vsyncpa [#allocation6], 1
    %614 = vsyncpa [#allocation9], 1
    %615 = vsyncpa [#allocation4], 1

// kernel: tpu_custom_call.1
$region0: #{tpu_custom_call.1}
  #allocation0 [shape = 'u32[]', space=smem, size = 0x4, offset = 0x4, fixed_abs, tag = 'smem constant byte address 0x4 - core index']
  #allocation1 [shape = 'u32[72,128]{1,0:T(1,128)}', space=vmem, size = 0x9000, scoped, tag = 'internal scratch']
  %s0 = inlined_call_operand.hbm [shape: bf16[16,16], index: 0, kind: input, shape index: {}]
  %s1 = inlined_call_operand.hbm [shape: bf16[16,256], index: 1, kind: input, shape index: {}]
  %s2 = inlined_call_operand.hbm [shape: f32[1,256], index: 2, kind: input, shape index: {}]
  %s3 = inlined_call_operand.hbm [shape: bf16[256,256], index: 3, kind: input, shape index: {}]
  %s4 = inlined_call_operand.vmem [shape: f32[1,256], index: 4, kind: input, shape index: {}]
  %s5 = inlined_call_operand.hbm [shape: bf16[256,128], index: 5, kind: input, shape index: {}]
  %s6 = inlined_call_operand.vmem [shape: f32[1,128], index: 6, kind: input, shape index: {}]
  %s7 = inlined_call_operand.hbm [shape: bf16[16,128], index: 7, kind: output, shape index: {}]
  %s8 = sld [smem:[#allocation0]]
  $region58: #{tpu_custom_call.1} parent=0
    _
  %s10 = ssub.s32 1, %s8
  %s11 = scalar_select 0, %s10, %s8
  $region1: #{tpu_custom_call.1} parent=0
    #allocation2 [shape = 'u8[4096]{0}', space=vmem, size = 0x1000, scoped, tag = 'input window, operand 0, single buffered']
    #allocation3 [shape = 's32[1]{0}', space=sflag, size = 0x4, scoped, tag = 'scoped memory for tpu_custom_call.1']
    #allocation4 [shape = 's32[1]{0}', space=sflag, size = 0x4, scoped, tag = 'scoped memory for tpu_custom_call.1']
    #allocation5 [shape = 'u8[8192]{0}', space=vmem, size = 0x2000, scoped, tag = 'input window, operand 1, single buffered']
    #allocation6 [shape = 's32[1]{0}', space=sflag, size = 0x4, scoped, tag = 'scoped memory for tpu_custom_call.1']
    #allocation7 [shape = 'u8[1024]{0}', space=vmem, size = 0x400, scoped, tag = 'input window, operand 2, single buffered']
    #allocation8 [shape = 'u8[131072]{0}', space=vmem, size = 0x20000, scoped, tag = 'input window, operand 3, single buffered']
    #allocation9 [shape = 's32[1]{0}', space=sflag, size = 0x4, scoped, tag = 'scoped memory for tpu_custom_call.1']
    #allocation10 [shape = 'u8[65536]{0}', space=vmem, size = 0x10000, scoped, tag = 'input window, operand 5, single buffered']
    #allocation11 [shape = 'u8[4096]{0}', space=vmem, size = 0x1000, scoped, tag = 'output window, operand 0, single buffered']
    %12 = vsyncpa [#allocation3], 0
    %13 = vsyncpa [#allocation6], 0
    %14 = vsyncpa [#allocation9], 0
    %15 = vsyncpa [#allocation4], 0
    // Predicated region
    $region2: #{tpu_custom_call.1} parent=1 // pred_check
      _
    $region3: #{tpu_custom_call.1} parent=1 // pred_check_branch
      %17 = sbr.rel (0) target = $region5
    $region4: #{tpu_custom_call.1} parent=1 // pred_region
      %19 = vsyncadd [#allocation3], 0
      %s20 = sshll.u32 %s0, 4
      %s21 = int_to_ptr.hbm [resolvable:$true] %s20
      %s22 = sshll.u32 [#allocation2], 4
      %s23 = int_to_ptr.vmem [resolvable:$true] %s22
      %28 = dma.hbm_to_vmem [thread:$0]  %s21, 128, %s23, [#allocation3], 64, 64, 4
    $region5: #{tpu_custom_call.1} parent=1 // pred_fallthru
      _
    // Predicated region
    $region6: #{tpu_custom_call.1} parent=1 // pred_check
      _
    $region7: #{tpu_custom_call.1} parent=1 // pred_check_branch
      %30 = sbr.rel (0) target = $region9
    $region8: #{tpu_custom_call.1} parent=1 // pred_region
      %32 = vsyncadd [#allocation6], 0
      %s33 = sshll.u32 %s1, 4
      %s34 = int_to_ptr.hbm [resolvable:$true] %s33
      %s35 = sshll.u32 [#allocation5], 4
      %s36 = int_to_ptr.vmem [resolvable:$true] %s35
      %41 = dma.hbm_to_vmem [thread:$0]  %s34, 256, %s36, [#allocation6], 128, 128, 8
    $region9: #{tpu_custom_call.1} parent=1 // pred_fallthru
      _
    // Predicated region
    $region10: #{tpu_custom_call.1} parent=1 // pred_check
      _
    $region11: #{tpu_custom_call.1} parent=1 // pred_check_branch
      %43 = sbr.rel (0) target = $region13
    $region12: #{tpu_custom_call.1} parent=1 // pred_region
      %45 = vsyncadd [#allocation6], 0
      %s47 = sshll.u32 %s2, 4
      %s48 = int_to_ptr.hbm [resolvable:$true] %s47
      %s49 = sshll.u32 [#allocation7], 4
      %s50 = int_to_ptr.vmem [resolvable:$true] %s49
      %52 = dma.hbm_to_vmem [thread:$0]  %s48, 32, %s50, [#allocation6]
    $region13: #{tpu_custom_call.1} parent=1 // pred_fallthru
      _
    // Predicated region
    $region14: #{tpu_custom_call.1} parent=1 // pred_check
      _
    $region15: #{tpu_custom_call.1} parent=1 // pred_check_branch
      %54 = sbr.rel (0) target = $region17
    $region16: #{tpu_custom_call.1} parent=1 // pred_region
      %56 = vsyncadd [#allocation9], 0
      %s57 = sshll.u32 %s3, 4
      %s58 = int_to_ptr.hbm [resolvable:$true] %s57
      %s59 = sshll.u32 [#allocation8], 4
      %s60 = int_to_ptr.vmem [resolvable:$true] %s59
      %65 = dma.hbm_to_vmem [thread:$0]  %s58, 4096, %s60, [#allocation9], 128, 128, 8
    $region17: #{tpu_custom_call.1} parent=1 // pred_fallthru
      _
    // Predicated region
    $region18: #{tpu_custom_call.1} parent=1 // pred_check
      _
    $region19: #{tpu_custom_call.1} parent=1 // pred_check_branch
      %67 = sbr.rel (0) target = $region21
    $region20: #{tpu_custom_call.1} parent=1 // pred_region
      _
    $region21: #{tpu_custom_call.1} parent=1 // pred_fallthru
      _
    // Predicated region
    $region22: #{tpu_custom_call.1} parent=1 // pred_check
      _
    $region23: #{tpu_custom_call.1} parent=1 // pred_check_branch
      %69 = sbr.rel (0) target = $region25
    $region24: #{tpu_custom_call.1} parent=1 // pred_region
      %71 = vsyncadd [#allocation9], 0
      %s72 = sshll.u32 %s5, 4
      %s73 = int_to_ptr.hbm [resolvable:$true] %s72
      %s74 = sshll.u32 [#allocation10], 4
      %s75 = int_to_ptr.vmem [resolvable:$true] %s74
      %80 = dma.hbm_to_vmem [thread:$0]  %s73, 2048, %s75, [#allocation9], 64, 64, 4
    $region25: #{tpu_custom_call.1} parent=1 // pred_fallthru
      _
    // Predicated region
    $region26: #{tpu_custom_call.1} parent=1 // pred_check
      _
    $region27: #{tpu_custom_call.1} parent=1 // pred_check_branch
      %82 = sbr.rel (0) target = $region29
    $region28: #{tpu_custom_call.1} parent=1 // pred_region
      _
    $region29: #{tpu_custom_call.1} parent=1 // pred_fallthru
      _
    // Predicated region
    $region30: #{tpu_custom_call.1} parent=1 // pred_check
      _
    $region31: #{tpu_custom_call.1} parent=1 // pred_check_branch
      %84 = sbr.rel (0) target = $region33
    $region32: #{tpu_custom_call.1} parent=1 // pred_region
      %86 = dma.done [#allocation3], 128
    $region33: #{tpu_custom_call.1} parent=1 // pred_fallthru
      _
    // Predicated region
    $region34: #{tpu_custom_call.1} parent=1 // pred_check
      _
    $region35: #{tpu_custom_call.1} parent=1 // pred_check_branch
      %88 = sbr.rel (0) target = $region37
    $region36: #{tpu_custom_call.1} parent=1 // pred_region
      %90 = dma.done [#allocation6], 256
    $region37: #{tpu_custom_call.1} parent=1 // pred_fallthru
      _
    // Predicated region
    $region38: #{tpu_custom_call.1} parent=1 // pred_check
      _
    $region39: #{tpu_custom_call.1} parent=1 // pred_check_branch
      %92 = sbr.rel (0) target = $region41
    $region40: #{tpu_custom_call.1} parent=1 // pred_region
      %94 = dma.done [#allocation6], 32
    $region41: #{tpu_custom_call.1} parent=1 // pred_fallthru
      _
    // Predicated region
    $region42: #{tpu_custom_call.1} parent=1 // pred_check
      _
    $region43: #{tpu_custom_call.1} parent=1 // pred_check_branch
      %96 = sbr.rel (0) target = $region45
    $region44: #{tpu_custom_call.1} parent=1 // pred_region
      %98 = dma.done [#allocation9], 4096
    $region45: #{tpu_custom_call.1} parent=1 // pred_fallthru
      _
    // Predicated region
    $region46: #{tpu_custom_call.1} parent=1 // pred_check
      _
    $region47: #{tpu_custom_call.1} parent=1 // pred_check_branch
      %100 = sbr.rel (0) target = $region49
    $region48: #{tpu_custom_call.1} parent=1 // pred_region
      %102 = dma.done [#allocation9], 2048
    $region49: #{tpu_custom_call.1} parent=1 // pred_fallthru
      _
    %v104 = vld [vmem:[#allocation2] sm:$0xf]
    %v105 = vld [vmem:[#allocation2 + $0x4] sm:$0xf]
    %v106 = vld [vmem:[#allocation5] sm:$0xff]
    %v107 = vld [vmem:[#allocation5 + $0x8] sm:$0xff]
    %v108 = vld [vmem:[#allocation7] sm:$0x3]
    %v110 = vperm.slane %v108, 0
    %v111 = vperm.slane %v108, 1
    %v116 = vunpack.c.l.b16 %v104
    %v117 = vunpack.c.l.b16 %v105
    %v118 = vpack.c.b16 %v117, %v116
    %v121 = vunpack.c.l.b16 %v106
    %v122 = vunpack.c.h.b16 %v106
    %v123 = vunpack.c.l.b16 %v107
    %v124 = vunpack.c.h.b16 %v107
    %v125 = vpack.c.b16 %v123, %v121
    %v126 = vpack.c.b16 %v124, %v122
    %vm129 = vcmask 130048
    %v131 = vsel %vm129, %v118, 0
    %133 = vmatpush.bf16.msra.mxu0 0
    %134 = vmatpush.bf16.msra.mxu0 0
    %135 = vmatpush.bf16.msra.mxu0 0
    %136 = vmatpush.bf16.msra.mxu0 0
    %137 = vmatpush.bf16.msra.mxu0 0
    %138 = vmatpush.bf16.msra.mxu0 0
    %139 = vmatpush.bf16.msra.mxu0 0
    %140 = vmatpush.bf16.msra.mxu0 %v125
    %141 = vmatmul.bf16.gmra.mxu0 %v131
    %v142 = vpop.f32.mrf.mxu0
    %v143 = vadd.f32 %v110, %v142
    %v144 = vpop.f32.mrf.mxu0
    %v145 = vadd.f32 %v110, %v144
    %146 = vdwg.mxu0
    %147 = vmatpush.bf16.msra.mxu0 0
    %148 = vmatpush.bf16.msra.mxu0 0
    %149 = vmatpush.bf16.msra.mxu0 0
    %150 = vmatpush.bf16.msra.mxu0 0
    %151 = vmatpush.bf16.msra.mxu0 0
    %152 = vmatpush.bf16.msra.mxu0 0
    %153 = vmatpush.bf16.msra.mxu0 0
    %154 = vmatpush.bf16.msra.mxu0 %v126
    %155 = vmatmul.bf16.gmra.mxu0 %v131
    %v156 = vpop.f32.mrf.mxu0
    %v157 = vadd.f32 %v111, %v156
    %v158 = vpop.f32.mrf.mxu0
    %v159 = vadd.f32 %v111, %v158
    %160 = vdwg.mxu0
    %v161 = vmax.f32 %v143, 0.0
    %v162 = vmax.f32 %v157, 0.0
    %v163 = vmax.f32 %v145, 0.0
    %v164 = vmax.f32 %v159, 0.0
    %v165 = vpack.c.bf16 %v163, %v161
    %v166 = vpack.c.bf16 %v164, %v162
    %v167 = vld [vmem:[#allocation8] sm:$0xff]
    %v168 = vld [vmem:[#allocation8 + $0x8] sm:$0xff]
    %v169 = vld [vmem:[#allocation8 + $0x10] sm:$0xff]
    %v170 = vld [vmem:[#allocation8 + $0x18] sm:$0xff]
    %v171 = vld [vmem:[#allocation8 + $0x20] sm:$0xff]
    %v172 = vld [vmem:[#allocation8 + $0x28] sm:$0xff]
    %v173 = vld [vmem:[#allocation8 + $0x30] sm:$0xff]
    %v174 = vld [vmem:[#allocation8 + $0x38] sm:$0xff]
    %v175 = vld [vmem:[#allocation8 + $0x40] sm:$0xff]
    %v176 = vld [vmem:[#allocation8 + $0x48] sm:$0xff]
    %v177 = vld [vmem:[#allocation8 + $0x50] sm:$0xff]
    %v178 = vld [vmem:[#allocation8 + $0x58] sm:$0xff]
    %v179 = vld [vmem:[#allocation8 + $0x60] sm:$0xff]
    %v180 = vld [vmem:[#allocation8 + $0x68] sm:$0xff]
    %v181 = vld [vmem:[#allocation8 + $0x70] sm:$0xff]
    %v182 = vld [vmem:[#allocation8 + $0x78] sm:$0xff]
    %v183 = vld [vmem:[#allocation8 + $0x80] sm:$0xff]
    %v184 = vld [vmem:[#allocation8 + $0x88] sm:$0xff]
    %v185 = vld [vmem:[#allocation8 + $0x90] sm:$0xff]
    %v186 = vld [vmem:[#allocation8 + $0x98] sm:$0xff]
    %v187 = vld [vmem:[#allocation8 + $0xa0] sm:$0xff]
    %v188 = vld [vmem:[#allocation8 + $0xa8] sm:$0xff]
    %v189 = vld [vmem:[#allocation8 + $0xb0] sm:$0xff]
    %v190 = vld [vmem:[#allocation8 + $0xb8] sm:$0xff]
    %v191 = vld [vmem:[#allocation8 + $0xc0] sm:$0xff]
    %v192 = vld [vmem:[#allocation8 + $0xc8] sm:$0xff]
    %v193 = vld [vmem:[#allocation8 + $0xd0] sm:$0xff]
    %v194 = vld [vmem:[#allocation8 + $0xd8] sm:$0xff]
    %v195 = vld [vmem:[#allocation8 + $0xe0] sm:$0xff]
    %v196 = vld [vmem:[#allocation8 + $0xe8] sm:$0xff]
    %v197 = vld [vmem:[#allocation8 + $0xf0] sm:$0xff]
    %v198 = vld [vmem:[#allocation8 + $0xf8] sm:$0xff]
    %v199 = vld [vmem:[%s4] sm:$0x3]
    %v201 = vperm.slane %v199, 0
    %v202 = vperm.slane %v199, 1
    %v237 = vunpack.c.l.b16 %v167
    %v238 = vunpack.c.h.b16 %v167
    %v239 = vunpack.c.l.b16 %v168
    %v240 = vunpack.c.h.b16 %v168
    %v241 = vunpack.c.l.b16 %v169
    %v242 = vunpack.c.h.b16 %v169
    %v243 = vunpack.c.l.b16 %v170
    %v244 = vunpack.c.h.b16 %v170
    %v245 = vunpack.c.l.b16 %v171
    %v246 = vunpack.c.h.b16 %v171
    %v247 = vunpack.c.l.b16 %v172
    %v248 = vunpack.c.h.b16 %v172
    %v249 = vunpack.c.l.b16 %v173
    %v250 = vunpack.c.h.b16 %v173
    %v251 = vunpack.c.l.b16 %v174
    %v252 = vunpack.c.h.b16 %v174
    %v253 = vunpack.c.l.b16 %v175
    %v254 = vunpack.c.h.b16 %v175
    %v255 = vunpack.c.l.b16 %v176
    %v256 = vunpack.c.h.b16 %v176
    %v257 = vunpack.c.l.b16 %v177
    %v258 = vunpack.c.h.b16 %v177
    %v259 = vunpack.c.l.b16 %v178
    %v260 = vunpack.c.h.b16 %v178
    %v261 = vunpack.c.l.b16 %v179
    %v262 = vunpack.c.h.b16 %v179
    %v263 = vunpack.c.l.b16 %v180
    %v264 = vunpack.c.h.b16 %v180
    %v265 = vunpack.c.l.b16 %v181
    %v266 = vunpack.c.h.b16 %v181
    %v267 = vunpack.c.l.b16 %v182
    %v268 = vunpack.c.h.b16 %v182
    %v269 = vunpack.c.l.b16 %v183
    %v270 = vunpack.c.h.b16 %v183
    %v271 = vunpack.c.l.b16 %v184
    %v272 = vunpack.c.h.b16 %v184
    %v273 = vunpack.c.l.b16 %v185
    %v274 = vunpack.c.h.b16 %v185
    %v275 = vunpack.c.l.b16 %v186
    %v276 = vunpack.c.h.b16 %v186
    %v277 = vunpack.c.l.b16 %v187
    %v278 = vunpack.c.h.b16 %v187
    %v279 = vunpack.c.l.b16 %v188
    %v280 = vunpack.c.h.b16 %v188
    %v281 = vunpack.c.l.b16 %v189
    %v282 = vunpack.c.h.b16 %v189
    %v283 = vunpack.c.l.b16 %v190
    %v284 = vunpack.c.h.b16 %v190
    %v285 = vunpack.c.l.b16 %v191
    %v286 = vunpack.c.h.b16 %v191
    %v287 = vunpack.c.l.b16 %v192
    %v288 = vunpack.c.h.b16 %v192
    %v289 = vunpack.c.l.b16 %v193
    %v290 = vunpack.c.h.b16 %v193
    %v291 = vunpack.c.l.b16 %v194
    %v292 = vunpack.c.h.b16 %v194
    %v293 = vunpack.c.l.b16 %v195
    %v294 = vunpack.c.h.b16 %v195
    %v295 = vunpack.c.l.b16 %v196
    %v296 = vunpack.c.h.b16 %v196
    %v297 = vunpack.c.l.b16 %v197
    %v298 = vunpack.c.h.b16 %v197
    %v299 = vunpack.c.l.b16 %v198
    %v300 = vunpack.c.h.b16 %v198
    %v301 = vpack.c.b16 %v239, %v237
    %v302 = vpack.c.b16 %v240, %v238
    %v303 = vpack.c.b16 %v243, %v241
    %v304 = vpack.c.b16 %v244, %v242
    %v305 = vpack.c.b16 %v247, %v245
    %v306 = vpack.c.b16 %v248, %v246
    %v307 = vpack.c.b16 %v251, %v249
    %v308 = vpack.c.b16 %v252, %v250
    %v309 = vpack.c.b16 %v255, %v253
    %v310 = vpack.c.b16 %v256, %v254
    %v311 = vpack.c.b16 %v259, %v257
    %v312 = vpack.c.b16 %v260, %v258
    %v313 = vpack.c.b16 %v263, %v261
    %v314 = vpack.c.b16 %v264, %v262
    %v315 = vpack.c.b16 %v267, %v265
    %v316 = vpack.c.b16 %v268, %v266
    %v317 = vpack.c.b16 %v271, %v269
    %v318 = vpack.c.b16 %v272, %v270
    %v319 = vpack.c.b16 %v275, %v273
    %v320 = vpack.c.b16 %v276, %v274
    %v321 = vpack.c.b16 %v279, %v277
    %v322 = vpack.c.b16 %v280, %v278
    %v323 = vpack.c.b16 %v283, %v281
    %v324 = vpack.c.b16 %v284, %v282
    %v325 = vpack.c.b16 %v287, %v285
    %v326 = vpack.c.b16 %v288, %v286
    %v327 = vpack.c.b16 %v291, %v289
    %v328 = vpack.c.b16 %v292, %v290
    %v329 = vpack.c.b16 %v295, %v293
    %v330 = vpack.c.b16 %v296, %v294
    %v331 = vpack.c.b16 %v299, %v297
    %v332 = vpack.c.b16 %v300, %v298
    %365 = vmatpush.bf16.msra.mxu0 %v315
    %366 = vmatpush.bf16.msra.mxu0 %v313
    %367 = vmatpush.bf16.msra.mxu0 %v311
    %368 = vmatpush.bf16.msra.mxu0 %v309
    %369 = vmatpush.bf16.msra.mxu0 %v307
    %370 = vmatpush.bf16.msra.mxu0 %v305
    %371 = vmatpush.bf16.msra.mxu0 %v303
    %372 = vmatpush.bf16.msra.mxu0 %v301
    %373 = vmatmul.bf16.gmra.mxu0 %v165
    %v374 = vpop.f32.mrf.mxu0
    %v375 = vadd.f32 %v201, %v374
    %v376 = vpop.f32.mrf.mxu0
    %v377 = vadd.f32 %v201, %v376
    %378 = vdwg.mxu0
    %379 = vmatpush.bf16.msra.mxu0 %v331
    %380 = vmatpush.bf16.msra.mxu0 %v329
    %381 = vmatpush.bf16.msra.mxu0 %v327
    %382 = vmatpush.bf16.msra.mxu0 %v325
    %383 = vmatpush.bf16.msra.mxu0 %v323
    %384 = vmatpush.bf16.msra.mxu0 %v321
    %385 = vmatpush.bf16.msra.mxu0 %v319
    %386 = vmatpush.bf16.msra.mxu0 %v317
    %387 = vmatmul.bf16.gmra.mxu0 %v166
    %v388 = vpop.f32.mrf.mxu0
    %v389 = vadd.f32 %v375, %v388
    %v390 = vpop.f32.mrf.mxu0
    %v391 = vadd.f32 %v377, %v390
    %392 = vdwg.mxu0
    %393 = vmatpush.bf16.msra.mxu0 %v316
    %394 = vmatpush.bf16.msra.mxu0 %v314
    %395 = vmatpush.bf16.msra.mxu0 %v312
    %396 = vmatpush.bf16.msra.mxu0 %v310
    %397 = vmatpush.bf16.msra.mxu0 %v308
    %398 = vmatpush.bf16.msra.mxu0 %v306
    %399 = vmatpush.bf16.msra.mxu0 %v304
    %400 = vmatpush.bf16.msra.mxu0 %v302
    %401 = vmatmul.bf16.gmra.mxu0 %v165
    %v402 = vpop.f32.mrf.mxu0
    %v403 = vadd.f32 %v202, %v402
    %v404 = vpop.f32.mrf.mxu0
    %v405 = vadd.f32 %v202, %v404
    %406 = vdwg.mxu0
    %407 = vmatpush.bf16.msra.mxu0 %v332
    %408 = vmatpush.bf16.msra.mxu0 %v330
    %409 = vmatpush.bf16.msra.mxu0 %v328
    %410 = vmatpush.bf16.msra.mxu0 %v326
    %411 = vmatpush.bf16.msra.mxu0 %v324
    %412 = vmatpush.bf16.msra.mxu0 %v322
    %413 = vmatpush.bf16.msra.mxu0 %v320
    %414 = vmatpush.bf16.msra.mxu0 %v318
    %415 = vmatmul.bf16.gmra.mxu0 %v166
    %v416 = vpop.f32.mrf.mxu0
    %v417 = vadd.f32 %v403, %v416
    %v418 = vpop.f32.mrf.mxu0
    %v419 = vadd.f32 %v405, %v418
    %420 = vdwg.mxu0
    %v421 = vmax.f32 %v389, 0.0
    %v422 = vmax.f32 %v417, 0.0
    %v423 = vmax.f32 %v391, 0.0
    %v424 = vmax.f32 %v419, 0.0
    %v425 = vpack.c.bf16 %v423, %v421
    %v426 = vpack.c.bf16 %v424, %v422
    %v427 = vld [vmem:[#allocation10] sm:$0xf]
    %v428 = vld [vmem:[#allocation10 + $0x4] sm:$0xf]
    %v429 = vld [vmem:[#allocation10 + $0x8] sm:$0xf]
    %v430 = vld [vmem:[#allocation10 + $0xc] sm:$0xf]
    %v431 = vld [vmem:[#allocation10 + $0x10] sm:$0xf]
    %v432 = vld [vmem:[#allocation10 + $0x14] sm:$0xf]
    %v433 = vld [vmem:[#allocation10 + $0x18] sm:$0xf]
    %v434 = vld [vmem:[#allocation10 + $0x1c] sm:$0xf]
    %v435 = vld [vmem:[#allocation10 + $0x20] sm:$0xf]
    %v436 = vld [vmem:[#allocation10 + $0x24] sm:$0xf]
    %v437 = vld [vmem:[#allocation10 + $0x28] sm:$0xf]
    %v438 = vld [vmem:[#allocation10 + $0x2c] sm:$0xf]
    %v439 = vld [vmem:[#allocation10 + $0x30] sm:$0xf]
    %v440 = vld [vmem:[#allocation10 + $0x34] sm:$0xf]
    %v441 = vld [vmem:[#allocation10 + $0x38] sm:$0xf]
    %v442 = vld [vmem:[#allocation10 + $0x3c] sm:$0xf]
    %v443 = vld [vmem:[#allocation10 + $0x40] sm:$0xf]
    %v444 = vld [vmem:[#allocation10 + $0x44] sm:$0xf]
    %v445 = vld [vmem:[#allocation10 + $0x48] sm:$0xf]
    %v446 = vld [vmem:[#allocation10 + $0x4c] sm:$0xf]
    %v447 = vld [vmem:[#allocation10 + $0x50] sm:$0xf]
    %v448 = vld [vmem:[#allocation10 + $0x54] sm:$0xf]
    %v449 = vld [vmem:[#allocation10 + $0x58] sm:$0xf]
    %v450 = vld [vmem:[#allocation10 + $0x5c] sm:$0xf]
    %v451 = vld [vmem:[#allocation10 + $0x60] sm:$0xf]
    %v452 = vld [vmem:[#allocation10 + $0x64] sm:$0xf]
    %v453 = vld [vmem:[#allocation10 + $0x68] sm:$0xf]
    %v454 = vld [vmem:[#allocation10 + $0x6c] sm:$0xf]
    %v455 = vld [vmem:[#allocation10 + $0x70] sm:$0xf]
    %v456 = vld [vmem:[#allocation10 + $0x74] sm:$0xf]
    %v457 = vld [vmem:[#allocation10 + $0x78] sm:$0xf]
    %v458 = vld [vmem:[#allocation10 + $0x7c] sm:$0xf]
    %v459 = vld [vmem:[%s6] sm:$0x1]
    %v461 = vperm.slane %v459, 0
    %v495 = vunpack.c.l.b16 %v427
    %v496 = vunpack.c.l.b16 %v428
    %v497 = vunpack.c.l.b16 %v429
    %v498 = vunpack.c.l.b16 %v430
    %v499 = vunpack.c.l.b16 %v431
    %v500 = vunpack.c.l.b16 %v432
    %v501 = vunpack.c.l.b16 %v433
    %v502 = vunpack.c.l.b16 %v434
    %v503 = vunpack.c.l.b16 %v435
    %v504 = vunpack.c.l.b16 %v436
    %v505 = vunpack.c.l.b16 %v437
    %v506 = vunpack.c.l.b16 %v438
    %v507 = vunpack.c.l.b16 %v439
    %v508 = vunpack.c.l.b16 %v440
    %v509 = vunpack.c.l.b16 %v441
    %v510 = vunpack.c.l.b16 %v442
    %v511 = vunpack.c.l.b16 %v443
    %v512 = vunpack.c.l.b16 %v444
    %v513 = vunpack.c.l.b16 %v445
    %v514 = vunpack.c.l.b16 %v446
    %v515 = vunpack.c.l.b16 %v447
    %v516 = vunpack.c.l.b16 %v448
    %v517 = vunpack.c.l.b16 %v449
    %v518 = vunpack.c.l.b16 %v450
    %v519 = vunpack.c.l.b16 %v451
    %v520 = vunpack.c.l.b16 %v452
    %v521 = vunpack.c.l.b16 %v453
    %v522 = vunpack.c.l.b16 %v454
    %v523 = vunpack.c.l.b16 %v455
    %v524 = vunpack.c.l.b16 %v456
    %v525 = vunpack.c.l.b16 %v457
    %v526 = vunpack.c.l.b16 %v458
    %v527 = vpack.c.b16 %v496, %v495
    %v528 = vpack.c.b16 %v498, %v497
    %v529 = vpack.c.b16 %v500, %v499
    %v530 = vpack.c.b16 %v502, %v501
    %v531 = vpack.c.b16 %v504, %v503
    %v532 = vpack.c.b16 %v506, %v505
    %v533 = vpack.c.b16 %v508, %v507
    %v534 = vpack.c.b16 %v510, %v509
    %v535 = vpack.c.b16 %v512, %v511
    %v536 = vpack.c.b16 %v514, %v513
    %v537 = vpack.c.b16 %v516, %v515
    %v538 = vpack.c.b16 %v518, %v517
    %v539 = vpack.c.b16 %v520, %v519
    %v540 = vpack.c.b16 %v522, %v521
    %v541 = vpack.c.b16 %v524, %v523
    %v542 = vpack.c.b16 %v526, %v525
    %559 = vmatpush.bf16.msra.mxu0 %v534
    %560 = vmatpush.bf16.msra.mxu0 %v533
    %561 = vmatpush.bf16.msra.mxu0 %v532
    %562 = vmatpush.bf16.msra.mxu0 %v531
    %563 = vmatpush.bf16.msra.mxu0 %v530
    %564 = vmatpush.bf16.msra.mxu0 %v529
    %565 = vmatpush.bf16.msra.mxu0 %v528
    %566 = vmatpush.bf16.msra.mxu0 %v527
    %567 = vmatmul.bf16.gmra.mxu0 %v425
    %v568 = vpop.f32.mrf.mxu0
    %v569 = vadd.f32 %v461, %v568
    %v570 = vpop.f32.mrf.mxu0
    %v571 = vadd.f32 %v461, %v570
    %572 = vdwg.mxu0
    %573 = vmatpush.bf16.msra.mxu0 %v542
    %574 = vmatpush.bf16.msra.mxu0 %v541
    %575 = vmatpush.bf16.msra.mxu0 %v540
    %576 = vmatpush.bf16.msra.mxu0 %v539
    %577 = vmatpush.bf16.msra.mxu0 %v538
    %578 = vmatpush.bf16.msra.mxu0 %v537
    %579 = vmatpush.bf16.msra.mxu0 %v536
    %580 = vmatpush.bf16.msra.mxu0 %v535
    %581 = vmatmul.bf16.gmra.mxu0 %v426
    %v582 = vpop.f32.mrf.mxu0
    %v583 = vadd.f32 %v569, %v582
    %v584 = vpop.f32.mrf.mxu0
    %v585 = vadd.f32 %v571, %v584
    %586 = vdwg.mxu0
    %v587 = vtanh.pop %v583
    %v588 = vtanh.pop %v585
    %v589 = vmul.f32 %v587, 2.0
    %v590 = vmul.f32 %v588, 2.0
    %v591 = vpack.c.bf16 %v589, %v589
    %v592 = vpack.c.bf16 %v590, %v590
    %593 = vst [vmem:[#allocation11] sm:$0xf] %v591
    %594 = vst [vmem:[#allocation11 + $0x4] sm:$0xf] %v592
    // Predicated region
    $region50: #{tpu_custom_call.1} parent=1 // pred_check
      _
    $region51: #{tpu_custom_call.1} parent=1 // pred_check_branch
      %596 = sbr.rel (0) target = $region53
    $region52: #{tpu_custom_call.1} parent=1 // pred_region
      %598 = vsyncadd [#allocation4], 0
      %s599 = sshll.u32 [#allocation11], 4
      %s600 = int_to_ptr.vmem [resolvable:$true] %s599
      %s601 = sshll.u32 %s7, 4
      %s602 = int_to_ptr.hbm [resolvable:$true] %s601
      %607 = dma.vmem_to_hbm [thread:$0]  %s600, 128, %s602, [#allocation4], 64, 64, 4
    $region53: #{tpu_custom_call.1} parent=1 // pred_fallthru
      _
    // Predicated region
    $region54: #{tpu_custom_call.1} parent=1 // pred_check
      _
    $region55: #{tpu_custom_call.1} parent=1 // pred_check_branch
      %609 = sbr.rel (0) target = $region57
    $region56: #{tpu_custom_call.1} parent=1 // pred_region
      %611 = dma.done [#allocation4], 128
    $region57: #{tpu_custom_call.1} parent=1 // pred_fallthru
      _
    %612 = vsyncpa [#allocation3], 1
    %613 = vsyncpa [#allocation6], 1
    %614 = vsyncpa [#allocation9], 1
    %615 = vsyncpa [#allocation4], 1

</llo_original>
